<compile_context>
chip_gen: v6e
topology: v6e:2x2x1
jax: 0.10.0
libtpu: 0.0.40
codegen_flags: <defaults>
</compile_context>

<pallas_src>
import functools

import jax
import jax.numpy as jnp
from jax.experimental import pallas as pl
from jax.experimental.pallas import tpu as pltpu


def _round_up(a, b):
    return -(-a // b) * b


def _softmax_wsum_kernel(p_ref, x_ref, y_ref, m_sc, den_sc, num_sc, *,
                         w_total, tw, mask_w, single_w):
    # p_ref : SMEM (1, 1) scalar parameter
    # x_ref : VMEM tile (tm, tw)  -- natural layout, reduction along lanes
    # y_ref : VMEM tile (tm, 1)
    # m/den/num scratch: VMEM (tm, 1) f32 online-softmax accumulators
    k = pl.program_id(1)
    p = p_ref[0, 0]
    x = x_ref[...].astype(jnp.float32)

    if mask_w:
        # Last W block may be ragged: mask out-of-range columns so the
        # per-row max / sums only see valid data.
        col = jax.lax.broadcasted_iota(jnp.int32, x.shape, 1) + k * tw
        valid = col < w_total
        x = jnp.where(valid, x, 0.0)
        s = jnp.where(valid, p * x, -jnp.inf)
    else:
        s = p * x

    if single_w:
        # Whole reduction axis fits in one block: single-pass fused softmax-
        # weighted-sum (no accumulator traffic).
        m = jnp.max(s, axis=-1, keepdims=True)            # (tm, 1)
        e = jnp.exp(s - m)                                 # (tm, tw)  EUP
        den = jnp.sum(e, axis=-1, keepdims=True)           # (tm, 1)
        num = jnp.sum(e * x, axis=-1, keepdims=True)        # (tm, 1)
        # Exact divide: pl.reciprocal(approx=True) would break 1e-5 tolerance.
        y_ref[...] = (num / den).astype(y_ref.dtype)
    else:
        # Online-softmax over W tiles (grid axis 1 is "arbitrary").
        @pl.when(k == 0)
        def _():
            m_sc[...] = jnp.full_like(m_sc, -jnp.inf)
            den_sc[...] = jnp.zeros_like(den_sc)
            num_sc[...] = jnp.zeros_like(num_sc)

        m_blk = jnp.max(s, axis=-1, keepdims=True)
        m_new = jnp.maximum(m_sc[...], m_blk)
        alpha = jnp.exp(m_sc[...] - m_new)                 # 0 on first step
        e = jnp.exp(s - m_new)
        den_sc[...] = alpha * den_sc[...] + jnp.sum(e, axis=-1, keepdims=True)
        num_sc[...] = alpha * num_sc[...] + jnp.sum(e * x, axis=-1, keepdims=True)
        m_sc[...] = m_new

        @pl.when(k == pl.num_programs(1) - 1)
        def _():
            y_ref[...] = (num_sc[...] / den_sc[...]).astype(y_ref.dtype)


def model_forward(p, x):
    """p: shape (1,) scalar parameter; x: arbitrary shape [..., W]."""
    orig_shape = x.shape
    W = orig_shape[-1]
    M = 1
    for d in orig_shape[:-1]:
        M *= d

    # ---------------- generation-aware byte budgets ------------------------
    try:
        kind = jax.devices()[0].device_kind.lower()
    except Exception:  # be conservative if the query fails
        kind = ""
    is_v7 = ("v7" in kind) or ("tpu7" in kind) or ("7x" in kind)
    # Per input block budget (double-buffered input + ~3 f32 temporaries =>
    # total footprint ~5x this number, well inside 64 MiB on v7x / 128 MiB on
    # v5e / v6e).
    input_budget = (2 if is_v7 else 4) * 1024 * 1024
    vmem_limit = (40 if is_v7 else 64) * 1024 * 1024

    # ---------------- W (reduction) axis tiling -----------------------------
    min_rows = 8
    if W * min_rows * 4 <= input_budget:
        tw, mask_w = W, False                      # whole reduction in one block
    else:
        tw = max(128, (input_budget // (min_rows * 4)) // 128 * 128)
        mask_w = (W % tw) != 0                     # ragged last W block -> mask
    grid_w = pl.cdiv(W, tw)
    single_w = grid_w == 1

    # ---------------- row axis tiling (sized by bytes) ----------------------
    tm = max(min_rows, (input_budget // (tw * 4)) // 8 * 8)
    if tm >= M:
        # v7x megacore: prefer >=2 "parallel" row steps, but only trade the
        # tile down while each step still moves >= ~1 MiB (per review).
        half = _round_up(pl.cdiv(M, 2), 8)
        if M >= 2 * min_rows and (M * tw * 4) // 2 >= (1 << 20) and half >= min_rows:
            tm = half
        else:
            tm = M                                  # tiny input: single row block
    grid_m = pl.cdiv(M, tm)

    # Free reshapes only (row-major bitcasts) -- no extra HBM passes.
    x2 = x.reshape(M, W)
    p2 = p.reshape(1, 1)

    kernel = functools.partial(_softmax_wsum_kernel,
                               w_total=W, tw=tw, mask_w=mask_w, single_w=single_w)

    y2 = pl.pallas_call(
        kernel,
        out_shape=jax.ShapeDtypeStruct((M, 1), x.dtype),
        grid_spec=pltpu.PrefetchScalarGridSpec(
            num_scalar_prefetch=0,
            grid=(grid_m, grid_w),
            in_specs=[
                # scalar parameter, resident in SMEM (constant block index)
                pl.BlockSpec((1, 1), lambda i, k: (0, 0),
                             memory_space=pltpu.MemorySpace.SMEM),
                # natural-layout x tile
                pl.BlockSpec((tm, tw), lambda i, k: (i, k)),
            ],
            out_specs=pl.BlockSpec((tm, 1), lambda i, k: (i, 0)),
            scratch_shapes=[
                pltpu.VMEM((tm, 1), jnp.float32),   # m  (running max)
                pltpu.VMEM((tm, 1), jnp.float32),   # den
                pltpu.VMEM((tm, 1), jnp.float32),   # num
            ],
        ),
        compiler_params=pltpu.CompilerParams(
            dimension_semantics=("parallel", "arbitrary"),
            vmem_limit_bytes=vmem_limit,
        ),
    )(p2, x2)

    return y2[:, 0].reshape(orig_shape[:-1])


if __name__ == "__main__":
    # Deterministic parameter init (matches nn.Parameter(torch.zeros(1)))
    p = jnp.zeros((1,), dtype=jnp.float32)

    # Small NCHW input
    key = jax.random.PRNGKey(0)
    x = jax.random.normal(key, (2, 4, 16, 16), dtype=jnp.float32)

    y = model_forward(p, x)
    jax.block_until_ready(y)

    # Reference check in plain JAX
    s_ref = jax.nn.softmax(p[0] * x, axis=-1)
    y_ref = jnp.sum(s_ref * x, axis=-1)
    assert y.shape == y_ref.shape == (2, 4, 16)
    assert jnp.allclose(y, y_ref, atol=1e-5, rtol=1e-5)

    print("KERNEL_OK")
</pallas_src>

<mosaic_0001>
module attributes {stable_mosaic.version = 11 : i64} {
  func.func @_softmax_wsum_kernel(%arg0: i32, %arg1: i32, %arg2: memref<1x1xf32, #tpu.memory_space<smem>>, %arg3: memref<128x16xf32, #tpu.memory_space<vmem>>, %arg4: memref<128x1xf32, #tpu.memory_space<vmem>>, %arg5: memref<128x1xf32, #tpu.memory_space<vmem>>, %arg6: memref<128x1xf32, #tpu.memory_space<vmem>>, %arg7: memref<128x1xf32, #tpu.memory_space<vmem>>) attributes {dimension_semantics = [#tpu.dimension_semantics<parallel>, #tpu.dimension_semantics<arbitrary>], iteration_bounds = array<i64: 1, 1>, scalar_prefetch = 0 : i64, scratch_operands = 3 : i64, tpu.core_type = #tpu.core_type<tc>, window_params = [{transform_indices = @transform_0, window_bounds = array<i64: 1, 1>}, {transform_indices = @transform_1, window_bounds = array<i64: 128, 16>}, {transform_indices = @transform_2, window_bounds = array<i64: 128, 1>}]} {
    %c0 = arith.constant 0 : index
    %c0_0 = arith.constant 0 : index
    %0 = memref.load %arg2[%c0, %c0_0] : memref<1x1xf32, #tpu.memory_space<smem>>
    %c0_1 = arith.constant 0 : index
    %c0_2 = arith.constant 0 : index
    %1 = vector.load %arg3[%c0_1, %c0_2] : memref<128x16xf32, #tpu.memory_space<vmem>>, vector<128x16xf32>
    %2 = vector.broadcast %0 : f32 to vector<128x16xf32>
    %3 = arith.mulf %2, %1 : vector<128x16xf32>
    %cst = arith.constant dense<0xFF800000> : vector<128xf32>
    %4 = vector.multi_reduction <maximumf>, %3, %cst [1] : vector<128x16xf32> to vector<128xf32>
    %5 = vector.shape_cast %4 : vector<128xf32> to vector<128x1xf32>
    %6 = vector.broadcast %5 : vector<128x1xf32> to vector<128x16xf32>
    %7 = arith.subf %3, %6 : vector<128x16xf32>
    %8 = math.exp %7 : vector<128x16xf32>
    %cst_3 = arith.constant dense<0.000000e+00> : vector<128xf32>
    %9 = vector.multi_reduction <add>, %8, %cst_3 [1] : vector<128x16xf32> to vector<128xf32>
    %10 = vector.shape_cast %9 : vector<128xf32> to vector<128x1xf32>
    %11 = arith.mulf %8, %1 : vector<128x16xf32>
    %cst_4 = arith.constant dense<0.000000e+00> : vector<128xf32>
    %12 = vector.multi_reduction <add>, %11, %cst_4 [1] : vector<128x16xf32> to vector<128xf32>
    %13 = vector.shape_cast %12 : vector<128xf32> to vector<128x1xf32>
    %14 = arith.divf %13, %10 : vector<128x1xf32>
    %c0_5 = arith.constant 0 : index
    %c0_6 = arith.constant 0 : index
    %15 = vector.load %arg4[%c0_5, %c0_6] : memref<128x1xf32, #tpu.memory_space<vmem>>, vector<128x1xf32>
    tpu.vector_store %arg4[%c0_5, %c0_6], %14 {strides = array<i32>} : memref<128x1xf32, #tpu.memory_space<vmem>>, vector<128x1xf32>,
    return
  }
  func.func @transform_0(%arg0: i32, %arg1: i32) -> (i32, i32) {
    %c0_i32 = arith.constant 0 : i32
    %c0_i32_0 = arith.constant 0 : i32
    %c0_i32_1 = arith.constant 0 : i32
    return %c0_i32, %c0_i32_0 : i32, i32
  }
  func.func @transform_1(%arg0: i32, %arg1: i32) -> (i32, i32) {
    %c0_i32 = arith.constant 0 : i32
    return %arg0, %arg1 : i32, i32
  }
  func.func @transform_2(%arg0: i32, %arg1: i32) -> (i32, i32) {
    %c0_i32 = arith.constant 0 : i32
    %c0_i32_0 = arith.constant 0 : i32
    return %arg0, %c0_i32 : i32, i32
  }
}

</mosaic_0001>

<llo_original>
// kernel: tpu_custom_call.1
$region0: #{tpu_custom_call.1}
  #allocation0 [shape = 'u32[]', space=smem, size = 0x4, offset = 0x4, fixed_abs, tag = 'smem constant byte address 0x4 - core index']
  #allocation1 [shape = 'u32[144,128]{1,0:T(1,128)}', space=vmem, size = 0x12000, scoped, tag = 'internal scratch']
  #allocation2 [shape = 'f32[128,1]{1,0:T(8,128)}', space=vmem, size = 0x10000, scoped, tag = 'scratch operand']
  #allocation3 [shape = 'f32[128,1]{1,0:T(8,128)}', space=vmem, size = 0x10000, scoped, tag = 'scratch operand']
  #allocation4 [shape = 'f32[128,1]{1,0:T(8,128)}', space=vmem, size = 0x10000, scoped, tag = 'scratch operand']
  #allocation5 [shape = 'f32[1,1]{1,0:T(1,128)S(6)}', space=smem, size = 0x200, scoped, tag = 'scoped memory for tpu_custom_call.1']
  %s0 = inlined_call_operand.<no memory space> [shape: f32[1,1], index: 0, kind: input, shape index: {}]
  %s1 = inlined_call_operand.vmem [shape: f32[128,16], index: 1, kind: input, shape index: {}]
  %s2 = inlined_call_operand.vmem [shape: f32[128,1], index: 2, kind: output, shape index: {}]
  %s3 = sld [smem:[#allocation0]]
  $region18: #{tpu_custom_call.1} parent=0
    _
  %s5 = ssub.s32 1, %s3
  %s6 = scalar_select 0, %s5, %s3
  %7 = sst [smem:[#allocation5]] %s0
  // Predicated region
  $region2: #{tpu_custom_call.1} parent=0 // pred_check
    _
  $region3: #{tpu_custom_call.1} parent=0 // pred_check_branch
    %9 = sbr.rel (0) target = $region5
  $region4: #{tpu_custom_call.1} parent=0 // pred_region
    _
  $region5: #{tpu_custom_call.1} parent=0 // pred_fallthru
    _
  // Predicated region
  $region6: #{tpu_custom_call.1} parent=0 // pred_check
    _
  $region7: #{tpu_custom_call.1} parent=0 // pred_check_branch
    %11 = sbr.rel (0) target = $region9
  $region8: #{tpu_custom_call.1} parent=0 // pred_region
    _
  $region9: #{tpu_custom_call.1} parent=0 // pred_fallthru
    _
  %s12 = sld [smem:[#allocation5]]
  %v13 = vld [vmem:[%s1] sm:$0xff]
  %v14 = vld [vmem:[%s1 + $0x8] sm:$0xff]
  %v15 = vld [vmem:[%s1 + $0x10] sm:$0xff]
  %v16 = vld [vmem:[%s1 + $0x18] sm:$0xff]
  %v17 = vld [vmem:[%s1 + $0x20] sm:$0xff]
  %v18 = vld [vmem:[%s1 + $0x28] sm:$0xff]
  %v19 = vld [vmem:[%s1 + $0x30] sm:$0xff]
  %v20 = vld [vmem:[%s1 + $0x38] sm:$0xff]
  %v21 = vld [vmem:[%s1 + $0x40] sm:$0xff]
  %v22 = vld [vmem:[%s1 + $0x48] sm:$0xff]
  %v23 = vld [vmem:[%s1 + $0x50] sm:$0xff]
  %v24 = vld [vmem:[%s1 + $0x58] sm:$0xff]
  %v25 = vld [vmem:[%s1 + $0x60] sm:$0xff]
  %v26 = vld [vmem:[%s1 + $0x68] sm:$0xff]
  %v27 = vld [vmem:[%s1 + $0x70] sm:$0xff]
  %v28 = vld [vmem:[%s1 + $0x78] sm:$0xff]
  %v29 = vstv %s12
  %v30 = vmul.f32 %v29, %v13
  %v31 = vmul.f32 %v29, %v14
  %v32 = vmul.f32 %v29, %v15
  %v33 = vmul.f32 %v29, %v16
  %v34 = vmul.f32 %v29, %v17
  %v35 = vmul.f32 %v29, %v18
  %v36 = vmul.f32 %v29, %v19
  %v37 = vmul.f32 %v29, %v20
  %v38 = vmul.f32 %v29, %v21
  %v39 = vmul.f32 %v29, %v22
  %v40 = vmul.f32 %v29, %v23
  %v41 = vmul.f32 %v29, %v24
  %v42 = vmul.f32 %v29, %v25
  %v43 = vmul.f32 %v29, %v26
  %v44 = vmul.f32 %v29, %v27
  %v45 = vmul.f32 %v29, %v28
  %vm46 = vcmask 130048
  %v47 = vsel %vm46, %v30, -inf
  %48 = vmax.xlane.f32.xlu0 %v47
  %v49 = vpop.xlane.xlu0 %48
  %v50 = vsel %vm46, %v31, -inf
  %51 = vmax.xlane.f32.xlu0 %v50
  %v52 = vpop.xlane.xlu0 %51
  %v53 = vsel %vm46, %v32, -inf
  %54 = vmax.xlane.f32.xlu0 %v53
  %v55 = vpop.xlane.xlu0 %54
  %v56 = vsel %vm46, %v33, -inf
  %57 = vmax.xlane.f32.xlu0 %v56
  %v58 = vpop.xlane.xlu0 %57
  %v59 = vsel %vm46, %v34, -inf
  %60 = vmax.xlane.f32.xlu0 %v59
  %v61 = vpop.xlane.xlu0 %60
  %v62 = vsel %vm46, %v35, -inf
  %63 = vmax.xlane.f32.xlu0 %v62
  %v64 = vpop.xlane.xlu0 %63
  %v65 = vsel %vm46, %v36, -inf
  %66 = vmax.xlane.f32.xlu0 %v65
  %v67 = vpop.xlane.xlu0 %66
  %v68 = vsel %vm46, %v37, -inf
  %69 = vmax.xlane.f32.xlu0 %v68
  %v70 = vpop.xlane.xlu0 %69
  %v71 = vsel %vm46, %v38, -inf
  %72 = vmax.xlane.f32.xlu0 %v71
  %v73 = vpop.xlane.xlu0 %72
  %v74 = vsel %vm46, %v39, -inf
  %75 = vmax.xlane.f32.xlu0 %v74
  %v76 = vpop.xlane.xlu0 %75
  %v77 = vsel %vm46, %v40, -inf
  %78 = vmax.xlane.f32.xlu0 %v77
  %v79 = vpop.xlane.xlu0 %78
  %v80 = vsel %vm46, %v41, -inf
  %81 = vmax.xlane.f32.xlu0 %v80
  %v82 = vpop.xlane.xlu0 %81
  %v83 = vsel %vm46, %v42, -inf
  %84 = vmax.xlane.f32.xlu0 %v83
  %v85 = vpop.xlane.xlu0 %84
  %v86 = vsel %vm46, %v43, -inf
  %87 = vmax.xlane.f32.xlu0 %v86
  %v88 = vpop.xlane.xlu0 %87
  %v89 = vsel %vm46, %v44, -inf
  %90 = vmax.xlane.f32.xlu0 %v89
  %v91 = vpop.xlane.xlu0 %90
  %v92 = vsel %vm46, %v45, -inf
  %93 = vmax.xlane.f32.xlu0 %v92
  %v94 = vpop.xlane.xlu0 %93
  %v95 = vsub.f32 %v30, %v49
  %v96 = vsub.f32 %v31, %v52
  %v97 = vsub.f32 %v32, %v55
  %v98 = vsub.f32 %v33, %v58
  %v99 = vsub.f32 %v34, %v61
  %v100 = vsub.f32 %v35, %v64
  %v101 = vsub.f32 %v36, %v67
  %v102 = vsub.f32 %v37, %v70
  %v103 = vsub.f32 %v38, %v73
  %v104 = vsub.f32 %v39, %v76
  %v105 = vsub.f32 %v40, %v79
  %v106 = vsub.f32 %v41, %v82
  %v107 = vsub.f32 %v42, %v85
  %v108 = vsub.f32 %v43, %v88
  %v109 = vsub.f32 %v44, %v91
  %v110 = vsub.f32 %v45, %v94
  %v111 = vmul.f32 %v95, 1.442695
  %v112 = vpow.pop %v111
  %v113 = vmul.f32 %v96, 1.442695
  %v114 = vpow.pop %v113
  %v115 = vmul.f32 %v97, 1.442695
  %v116 = vpow.pop %v115
  %v117 = vmul.f32 %v98, 1.442695
  %v118 = vpow.pop %v117
  %v119 = vmul.f32 %v99, 1.442695
  %v120 = vpow.pop %v119
  %v121 = vmul.f32 %v100, 1.442695
  %v122 = vpow.pop %v121
  %v123 = vmul.f32 %v101, 1.442695
  %v124 = vpow.pop %v123
  %v125 = vmul.f32 %v102, 1.442695
  %v126 = vpow.pop %v125
  %v127 = vmul.f32 %v103, 1.442695
  %v128 = vpow.pop %v127
  %v129 = vmul.f32 %v104, 1.442695
  %v130 = vpow.pop %v129
  %v131 = vmul.f32 %v105, 1.442695
  %v132 = vpow.pop %v131
  %v133 = vmul.f32 %v106, 1.442695
  %v134 = vpow.pop %v133
  %v135 = vmul.f32 %v107, 1.442695
  %v136 = vpow.pop %v135
  %v137 = vmul.f32 %v108, 1.442695
  %v138 = vpow.pop %v137
  %v139 = vmul.f32 %v109, 1.442695
  %v140 = vpow.pop %v139
  %v141 = vmul.f32 %v110, 1.442695
  %v142 = vpow.pop %v141
  %v143 = vsel %vm46, %v112, 0.0
  %144 = vadd.xlane.f32.xlu0 %v143
  %v145 = vpop.xlane.xlu0 %144
  %v146 = vsel %vm46, %v114, 0.0
  %147 = vadd.xlane.f32.xlu0 %v146
  %v148 = vpop.xlane.xlu0 %147
  %v149 = vsel %vm46, %v116, 0.0
  %150 = vadd.xlane.f32.xlu0 %v149
  %v151 = vpop.xlane.xlu0 %150
  %v152 = vsel %vm46, %v118, 0.0
  %153 = vadd.xlane.f32.xlu0 %v152
  %v154 = vpop.xlane.xlu0 %153
  %v155 = vsel %vm46, %v120, 0.0
  %156 = vadd.xlane.f32.xlu0 %v155
  %v157 = vpop.xlane.xlu0 %156
  %v158 = vsel %vm46, %v122, 0.0
  %159 = vadd.xlane.f32.xlu0 %v158
  %v160 = vpop.xlane.xlu0 %159
  %v161 = vsel %vm46, %v124, 0.0
  %162 = vadd.xlane.f32.xlu0 %v161
  %v163 = vpop.xlane.xlu0 %162
  %v164 = vsel %vm46, %v126, 0.0
  %165 = vadd.xlane.f32.xlu0 %v164
  %v166 = vpop.xlane.xlu0 %165
  %v167 = vsel %vm46, %v128, 0.0
  %168 = vadd.xlane.f32.xlu0 %v167
  %v169 = vpop.xlane.xlu0 %168
  %v170 = vsel %vm46, %v130, 0.0
  %171 = vadd.xlane.f32.xlu0 %v170
  %v172 = vpop.xlane.xlu0 %171
  %v173 = vsel %vm46, %v132, 0.0
  %174 = vadd.xlane.f32.xlu0 %v173
  %v175 = vpop.xlane.xlu0 %174
  %v176 = vsel %vm46, %v134, 0.0
  %177 = vadd.xlane.f32.xlu0 %v176
  %v178 = vpop.xlane.xlu0 %177
  %v179 = vsel %vm46, %v136, 0.0
  %180 = vadd.xlane.f32.xlu0 %v179
  %v181 = vpop.xlane.xlu0 %180
  %v182 = vsel %vm46, %v138, 0.0
  %183 = vadd.xlane.f32.xlu0 %v182
  %v184 = vpop.xlane.xlu0 %183
  %v185 = vsel %vm46, %v140, 0.0
  %186 = vadd.xlane.f32.xlu0 %v185
  %v187 = vpop.xlane.xlu0 %186
  %v188 = vsel %vm46, %v142, 0.0
  %189 = vadd.xlane.f32.xlu0 %v188
  %v190 = vpop.xlane.xlu0 %189
  %v191 = vmul.f32 %v112, %v13
  %v192 = vmul.f32 %v114, %v14
  %v193 = vmul.f32 %v116, %v15
  %v194 = vmul.f32 %v118, %v16
  %v195 = vmul.f32 %v120, %v17
  %v196 = vmul.f32 %v122, %v18
  %v197 = vmul.f32 %v124, %v19
  %v198 = vmul.f32 %v126, %v20
  %v199 = vmul.f32 %v128, %v21
  %v200 = vmul.f32 %v130, %v22
  %v201 = vmul.f32 %v132, %v23
  %v202 = vmul.f32 %v134, %v24
  %v203 = vmul.f32 %v136, %v25
  %v204 = vmul.f32 %v138, %v26
  %v205 = vmul.f32 %v140, %v27
  %v206 = vmul.f32 %v142, %v28
  %v207 = vsel %vm46, %v191, 0.0
  %208 = vadd.xlane.f32.xlu0 %v207
  %v209 = vpop.xlane.xlu0 %208
  %v210 = vsel %vm46, %v192, 0.0
  %211 = vadd.xlane.f32.xlu0 %v210
  %v212 = vpop.xlane.xlu0 %211
  %v213 = vsel %vm46, %v193, 0.0
  %214 = vadd.xlane.f32.xlu0 %v213
  %v215 = vpop.xlane.xlu0 %214
  %v216 = vsel %vm46, %v194, 0.0
  %217 = vadd.xlane.f32.xlu0 %v216
  %v218 = vpop.xlane.xlu0 %217
  %v219 = vsel %vm46, %v195, 0.0
  %220 = vadd.xlane.f32.xlu0 %v219
  %v221 = vpop.xlane.xlu0 %220
  %v222 = vsel %vm46, %v196, 0.0
  %223 = vadd.xlane.f32.xlu0 %v222
  %v224 = vpop.xlane.xlu0 %223
  %v225 = vsel %vm46, %v197, 0.0
  %226 = vadd.xlane.f32.xlu0 %v225
  %v227 = vpop.xlane.xlu0 %226
  %v228 = vsel %vm46, %v198, 0.0
  %229 = vadd.xlane.f32.xlu0 %v228
  %v230 = vpop.xlane.xlu0 %229
  %v231 = vsel %vm46, %v199, 0.0
  %232 = vadd.xlane.f32.xlu0 %v231
  %v233 = vpop.xlane.xlu0 %232
  %v234 = vsel %vm46, %v200, 0.0
  %235 = vadd.xlane.f32.xlu0 %v234
  %v236 = vpop.xlane.xlu0 %235
  %v237 = vsel %vm46, %v201, 0.0
  %238 = vadd.xlane.f32.xlu0 %v237
  %v239 = vpop.xlane.xlu0 %238
  %v240 = vsel %vm46, %v202, 0.0
  %241 = vadd.xlane.f32.xlu0 %v240
  %v242 = vpop.xlane.xlu0 %241
  %v243 = vsel %vm46, %v203, 0.0
  %244 = vadd.xlane.f32.xlu0 %v243
  %v245 = vpop.xlane.xlu0 %244
  %v246 = vsel %vm46, %v204, 0.0
  %247 = vadd.xlane.f32.xlu0 %v246
  %v248 = vpop.xlane.xlu0 %247
  %v249 = vsel %vm46, %v205, 0.0
  %250 = vadd.xlane.f32.xlu0 %v249
  %v251 = vpop.xlane.xlu0 %250
  %v252 = vsel %vm46, %v206, 0.0
  %253 = vadd.xlane.f32.xlu0 %v252
  %v254 = vpop.xlane.xlu0 %253
  %v255 = vrcp.pop %v145
  %v256 = vmul.f32 %v209, %v255
  %v257 = vrcp.pop %v148
  %v258 = vmul.f32 %v212, %v257
  %v259 = vrcp.pop %v151
  %v260 = vmul.f32 %v215, %v259
  %v261 = vrcp.pop %v154
  %v262 = vmul.f32 %v218, %v261
  %v263 = vrcp.pop %v157
  %v264 = vmul.f32 %v221, %v263
  %v265 = vrcp.pop %v160
  %v266 = vmul.f32 %v224, %v265
  %v267 = vrcp.pop %v163
  %v268 = vmul.f32 %v227, %v267
  %v269 = vrcp.pop %v166
  %v270 = vmul.f32 %v230, %v269
  %v271 = vrcp.pop %v169
  %v272 = vmul.f32 %v233, %v271
  %v273 = vrcp.pop %v172
  %v274 = vmul.f32 %v236, %v273
  %v275 = vrcp.pop %v175
  %v276 = vmul.f32 %v239, %v275
  %v277 = vrcp.pop %v178
  %v278 = vmul.f32 %v242, %v277
  %v279 = vrcp.pop %v181
  %v280 = vmul.f32 %v245, %v279
  %v281 = vrcp.pop %v184
  %v282 = vmul.f32 %v248, %v281
  %v283 = vrcp.pop %v187
  %v284 = vmul.f32 %v251, %v283
  %v285 = vrcp.pop %v190
  %v286 = vmul.f32 %v254, %v285
  %vm287 = vcmask 7168
  %288 = vst.msk [vmem:[%s2] sm:$0xff] %vm287, %v256
  %289 = vst.msk [vmem:[%s2 + $0x8] sm:$0xff] %vm287, %v258
  %290 = vst.msk [vmem:[%s2 + $0x10] sm:$0xff] %vm287, %v260
  %291 = vst.msk [vmem:[%s2 + $0x18] sm:$0xff] %vm287, %v262
  %292 = vst.msk [vmem:[%s2 + $0x20] sm:$0xff] %vm287, %v264
  %293 = vst.msk [vmem:[%s2 + $0x28] sm:$0xff] %vm287, %v266
  %294 = vst.msk [vmem:[%s2 + $0x30] sm:$0xff] %vm287, %v268
  %295 = vst.msk [vmem:[%s2 + $0x38] sm:$0xff] %vm287, %v270
  %296 = vst.msk [vmem:[%s2 + $0x40] sm:$0xff] %vm287, %v272
  %297 = vst.msk [vmem:[%s2 + $0x48] sm:$0xff] %vm287, %v274
  %298 = vst.msk [vmem:[%s2 + $0x50] sm:$0xff] %vm287, %v276
  %299 = vst.msk [vmem:[%s2 + $0x58] sm:$0xff] %vm287, %v278
  %300 = vst.msk [vmem:[%s2 + $0x60] sm:$0xff] %vm287, %v280
  %301 = vst.msk [vmem:[%s2 + $0x68] sm:$0xff] %vm287, %v282
  %302 = vst.msk [vmem:[%s2 + $0x70] sm:$0xff] %vm287, %v284
  %303 = vst.msk [vmem:[%s2 + $0x78] sm:$0xff] %vm287, %v286
  // Predicated region
  $region10: #{tpu_custom_call.1} parent=0 // pred_check
    _
  $region11: #{tpu_custom_call.1} parent=0 // pred_check_branch
    %305 = sbr.rel (0) target = $region13
  $region12: #{tpu_custom_call.1} parent=0 // pred_region
    _
  $region13: #{tpu_custom_call.1} parent=0 // pred_fallthru
    _
  // Predicated region
  $region14: #{tpu_custom_call.1} parent=0 // pred_check
    _
  $region15: #{tpu_custom_call.1} parent=0 // pred_check_branch
    %307 = sbr.rel (0) target = $region17
  $region16: #{tpu_custom_call.1} parent=0 // pred_region
    _
  $region17: #{tpu_custom_call.1} parent=0 // pred_fallthru
    _

</llo_original>
